<compile_context>
chip_gen: v6e
topology: v6e:2x2x1
jax: 0.10.0
libtpu: 0.0.40
codegen_flags: <defaults>
</compile_context>

<pallas_src>
import functools

import jax
import jax.numpy as jnp
from jax.experimental import pallas as pl
from jax.experimental.pallas import tpu as pltpu

LANE = 128
SUBLANE = 8


def _round_up(x, m):
    return ((x + m - 1) // m) * m


def _make_mlp_policy_kernel(n_layers, ac_dim):
    """Kernel for an MLP with `n_layers` hidden (tanh) layers + 1 linear output layer."""

    def kernel(*refs):
        # refs: [obs, W0, b0, ..., W_L, b_L, mean_out]
        obs_ref = refs[0]
        n_param_refs = 2 * (n_layers + 1)
        param_refs = refs[1:1 + n_param_refs]
        mean_ref = refs[-1]

        # In-kernel bf16 cast of the f32 obs tile (replaces the wrapper pad/cast pass).
        h = obs_ref[...].astype(jnp.bfloat16)                # (TM, ob_dim)

        # Hidden layers: Linear -> Tanh (matches ptu.build_mlp's tanh activation).
        for i in range(n_layers):
            w = param_refs[2 * i][...]                       # bf16 (in, 128)
            b = param_refs[2 * i + 1][...]                   # f32  (1, 128)
            z = jnp.dot(h, w, preferred_element_type=jnp.float32) + b
            h = jnp.tanh(z).astype(jnp.bfloat16)             # back to bf16 for next MXU pass

        # Output layer: Linear (identity output activation), f32 result.
        w = param_refs[2 * n_layers][...]                    # bf16 (128, 128) padded
        b = param_refs[2 * n_layers + 1][...]                # f32  (1, 128)   padded
        z = jnp.dot(h, w, preferred_element_type=jnp.float32) + b   # (TM, ac_pad)
        # Store only the real action columns: narrow (TM, ac_dim) block -> ~32x less
        # output HBM traffic than writing the lane-padded result.
        mean_ref[...] = z[:, :ac_dim]

    return kernel


def mlp_policy_forward(obs, params, logstd, *, n_layers):
    """Pallas-backed MLPPolicy.forward: returns (mean, std).

    obs:     (B, ob_dim) float32
    params:  list of (W_i, b_i); W_i is (in, out), b_i is (1, out)
    logstd:  (ac_dim,) float32
    """
    B, ob_dim = obs.shape
    ac_dim = params[-1][0].shape[1]
    size = params[0][0].shape[1]

    hidden_pad = _round_up(size, LANE)      # 64 -> 128: full-lane activations / MXU width
    ac_pad = _round_up(ac_dim, LANE)        # 4  -> 128: full-lane final MXU pass

    # Batch tile selection (per-grid-step overhead vs. megacore split):
    #   * small batches (rollout case): one tile sized to the batch (f32 sublane = 8)
    #   * large batches: big tiles (up to 1024 rows; still tiny in VMEM) but always
    #     >= 2 tiles so ("parallel",) can spread work over v7x's two TensorCores.
    if B <= 128:
        TM = _round_up(B, SUBLANE)
    else:
        TM = min(1024, _round_up(-(-B // 2), LANE))
    grid = (pl.cdiv(B, TM),)

    # Pad weights/biases to lane-dense widths: bf16 weights, f32 biases. Padding is
    # exact: extra columns give tanh(0)=0 activations which hit zero rows of the next
    # padded weight, so results are unchanged.  (In a real policy these would be
    # pre-padded once, not per forward call.)
    in_dims = [ob_dim] + [hidden_pad] * n_layers
    out_dims = [hidden_pad] * n_layers + [ac_pad]
    flat_params = []
    for (w, b), in_p, out_p in zip(params, in_dims, out_dims):
        wp = jnp.zeros((in_p, out_p), jnp.bfloat16)
        wp = wp.at[: w.shape[0], : w.shape[1]].set(w.astype(jnp.bfloat16))
        bp = jnp.zeros((1, out_p), jnp.float32)
        bp = bp.at[:, : b.shape[-1]].set(b.reshape(1, -1).astype(jnp.float32))
        flat_params += [wp, bp]

    kernel = _make_mlp_policy_kernel(n_layers, ac_dim)

    # obs (raw f32, no wrapper pad) is tiled over the batch grid; weights/biases use
    # constant index maps so they are DMA'd once and stay VMEM-resident across steps.
    in_specs = [pl.BlockSpec((TM, ob_dim), lambda i: (i, 0))]
    for p in flat_params:
        in_specs.append(pl.BlockSpec(p.shape, lambda i: (0, 0)))

    mean = pl.pallas_call(
        kernel,
        grid=grid,
        out_shape=jax.ShapeDtypeStruct((B, ac_dim), jnp.float32),
        in_specs=in_specs,
        out_specs=pl.BlockSpec((TM, ac_dim), lambda i: (i, 0)),
        compiler_params=pltpu.CompilerParams(
            dimension_semantics=("parallel",)),   # shards batch tiles across v7x's 2 TCs
    )(obs, *flat_params)

    # std = exp(logstd): tiny, observation-independent — left to XLA outside the kernel.
    std = jnp.exp(logstd)
    return mean, std


def _init_params(key, ob_dim, ac_dim, n_layers, size):
    """Deterministic synthetic initialization of the mean_net MLP parameters."""
    dims = [ob_dim] + [size] * n_layers + [ac_dim]
    params = []
    for i in range(len(dims) - 1):
        key, wk = jax.random.split(key)
        fan_in, fan_out = dims[i], dims[i + 1]
        w = (jax.random.normal(wk, (fan_in, fan_out), dtype=jnp.float32)
             * (1.0 / jnp.sqrt(fan_in)))
        b = jnp.zeros((1, fan_out), dtype=jnp.float32)
        params.append((w, b))
    return params


def _reference_forward_bf16(obs, params, logstd, n_layers):
    """Pure-JAX reference mirroring the kernel's bf16-matmul / f32-accumulate path."""
    h = obs.astype(jnp.bfloat16)
    for i, (w, b) in enumerate(params):
        z = jnp.dot(h, w.astype(jnp.bfloat16),
                    preferred_element_type=jnp.float32) + b.astype(jnp.float32)
        if i < n_layers:
            h = jnp.tanh(z).astype(jnp.bfloat16)
        else:
            h = z
    return h, jnp.exp(logstd)


def _reference_forward_f32(obs, params, logstd, n_layers):
    """Pure-f32 reference matching the PyTorch baseline numerics."""
    h = obs
    for i, (w, b) in enumerate(params):
        h = jnp.dot(h, w, preferred_element_type=jnp.float32) + b
        if i < n_layers:
            h = jnp.tanh(h)
    return h, jnp.exp(logstd)


if __name__ == "__main__":
    # Shapes consistent with the module: batch=8, ob_dim=16,
    # n_layers=2 hidden layers of size 64 (self.size is hard-coded to 64), ac_dim=4.
    batch, ob_dim, ac_dim, n_layers, size = 8, 16, 4, 2, 64

    key = jax.random.PRNGKey(0)
    key, obs_key, p_key = jax.random.split(key, 3)

    obs = jax.random.normal(obs_key, (batch, ob_dim), dtype=jnp.float32)
    params = _init_params(p_key, ob_dim, ac_dim, n_layers, size)
    # nn.Parameter(torch.zeros(ac_dim)) -> logstd initialized to zeros
    logstd = jnp.zeros((ac_dim,), dtype=jnp.float32)

    fwd = jax.jit(functools.partial(mlp_policy_forward, n_layers=n_layers))
    mean, std = fwd(obs, params, logstd)
    jax.block_until_ready((mean, std))

    # Check against the bf16-mirrored reference (same numerics, tight tolerance) ...
    ref_mean, ref_std = _reference_forward_bf16(obs, params, logstd, n_layers)
    assert mean.shape == (batch, ac_dim)
    assert std.shape == (ac_dim,)
    assert jnp.allclose(mean, ref_mean, atol=1e-3, rtol=1e-3)
    assert jnp.allclose(std, ref_std, atol=1e-6, rtol=1e-6)
    # ... and against the true f32 baseline (looser tolerance for the bf16 MXU path).
    ref_mean_f32, _ = _reference_forward_f32(obs, params, logstd, n_layers)
    assert jnp.allclose(mean, ref_mean_f32, atol=5e-2, rtol=5e-2)

    # TODO(synk): MultivariateNormal distribution object (rsample/log_prob) has no
    # Pallas equivalent; the kernel returns its parameters (mean, std) instead.
    print("KERNEL_OK")
</pallas_src>

<mosaic_0001>
module attributes {stable_mosaic.version = 11 : i64} {
  func.func @kernel(%arg0: i32, %arg1: memref<8x16xf32, #tpu.memory_space<vmem>>, %arg2: memref<16x128xbf16, #tpu.memory_space<vmem>>, %arg3: memref<1x128xf32, #tpu.memory_space<vmem>>, %arg4: memref<128x128xbf16, #tpu.memory_space<vmem>>, %arg5: memref<1x128xf32, #tpu.memory_space<vmem>>, %arg6: memref<128x128xbf16, #tpu.memory_space<vmem>>, %arg7: memref<1x128xf32, #tpu.memory_space<vmem>>, %arg8: memref<8x4xf32, #tpu.memory_space<vmem>>) attributes {dimension_semantics = [#tpu.dimension_semantics<parallel>], iteration_bounds = array<i64: 1>, scalar_prefetch = 0 : i64, scratch_operands = 0 : i64, tpu.core_type = #tpu.core_type<tc>, window_params = [{transform_indices = @transform_0, window_bounds = array<i64: 8, 16>}, {pipeline_mode = #tpu.pipeline_mode<synchronous>, transform_indices = @transform_1, window_bounds = array<i64: 16, 128>}, {pipeline_mode = #tpu.pipeline_mode<synchronous>, transform_indices = @transform_2, window_bounds = array<i64: 1, 128>}, {pipeline_mode = #tpu.pipeline_mode<synchronous>, transform_indices = @transform_3, window_bounds = array<i64: 128, 128>}, {pipeline_mode = #tpu.pipeline_mode<synchronous>, transform_indices = @transform_4, window_bounds = array<i64: 1, 128>}, {pipeline_mode = #tpu.pipeline_mode<synchronous>, transform_indices = @transform_5, window_bounds = array<i64: 128, 128>}, {pipeline_mode = #tpu.pipeline_mode<synchronous>, transform_indices = @transform_6, window_bounds = array<i64: 1, 128>}, {transform_indices = @transform_7, window_bounds = array<i64: 8, 4>}]} {
    %c0 = arith.constant 0 : index
    %c0_0 = arith.constant 0 : index
    %0 = vector.load %arg1[%c0, %c0_0] : memref<8x16xf32, #tpu.memory_space<vmem>>, vector<8x16xf32>
    %1 = arith.truncf %0 : vector<8x16xf32> to vector<8x16xbf16>
    %c0_1 = arith.constant 0 : index
    %c0_2 = arith.constant 0 : index
    %2 = vector.load %arg2[%c0_1, %c0_2] : memref<16x128xbf16, #tpu.memory_space<vmem>>, vector<16x128xbf16>
    %c0_3 = arith.constant 0 : index
    %c0_4 = arith.constant 0 : index
    %3 = vector.load %arg3[%c0_3, %c0_4] : memref<1x128xf32, #tpu.memory_space<vmem>>, vector<1x128xf32>
    %cst = arith.constant dense<0.000000e+00> : vector<8x128xf32>
    %4 = tpu.matmul %1, %2, %cst {dimension_numbers = #tpu.dot_dimension_numbers<[1], [0], [0], [1], [0, 0, 1, 1], [], []>} : vector<8x16xbf16>, vector<16x128xbf16>, vector<8x128xf32> -> vector<8x128xf32>
    %5 = vector.broadcast %3 : vector<1x128xf32> to vector<8x128xf32>
    %6 = arith.addf %4, %5 : vector<8x128xf32>
    %7 = math.tanh %6 : vector<8x128xf32>
    %8 = arith.truncf %7 : vector<8x128xf32> to vector<8x128xbf16>
    %c0_5 = arith.constant 0 : index
    %c0_6 = arith.constant 0 : index
    %9 = vector.load %arg4[%c0_5, %c0_6] : memref<128x128xbf16, #tpu.memory_space<vmem>>, vector<128x128xbf16>
    %c0_7 = arith.constant 0 : index
    %c0_8 = arith.constant 0 : index
    %10 = vector.load %arg5[%c0_7, %c0_8] : memref<1x128xf32, #tpu.memory_space<vmem>>, vector<1x128xf32>
    %cst_9 = arith.constant dense<0.000000e+00> : vector<8x128xf32>
    %11 = tpu.matmul %8, %9, %cst_9 {dimension_numbers = #tpu.dot_dimension_numbers<[1], [0], [0], [1], [0, 0, 1, 1], [], []>} : vector<8x128xbf16>, vector<128x128xbf16>, vector<8x128xf32> -> vector<8x128xf32>
    %12 = vector.broadcast %10 : vector<1x128xf32> to vector<8x128xf32>
    %13 = arith.addf %11, %12 : vector<8x128xf32>
    %14 = math.tanh %13 : vector<8x128xf32>
    %15 = arith.truncf %14 : vector<8x128xf32> to vector<8x128xbf16>
    %c0_10 = arith.constant 0 : index
    %c0_11 = arith.constant 0 : index
    %16 = vector.load %arg6[%c0_10, %c0_11] : memref<128x128xbf16, #tpu.memory_space<vmem>>, vector<128x128xbf16>
    %c0_12 = arith.constant 0 : index
    %c0_13 = arith.constant 0 : index
    %17 = vector.load %arg7[%c0_12, %c0_13] : memref<1x128xf32, #tpu.memory_space<vmem>>, vector<1x128xf32>
    %cst_14 = arith.constant dense<0.000000e+00> : vector<8x128xf32>
    %18 = tpu.matmul %15, %16, %cst_14 {dimension_numbers = #tpu.dot_dimension_numbers<[1], [0], [0], [1], [0, 0, 1, 1], [], []>} : vector<8x128xbf16>, vector<128x128xbf16>, vector<8x128xf32> -> vector<8x128xf32>
    %19 = vector.broadcast %17 : vector<1x128xf32> to vector<8x128xf32>
    %20 = arith.addf %18, %19 : vector<8x128xf32>
    %21 = vector.extract_strided_slice %20 {offsets = [0, 0], sizes = [8, 4], strides = [1, 1]} : vector<8x128xf32> to vector<8x4xf32>
    %c0_15 = arith.constant 0 : index
    %c0_16 = arith.constant 0 : index
    %22 = vector.load %arg8[%c0_15, %c0_16] : memref<8x4xf32, #tpu.memory_space<vmem>>, vector<8x4xf32>
    tpu.vector_store %arg8[%c0_15, %c0_16], %21 {strides = array<i32>} : memref<8x4xf32, #tpu.memory_space<vmem>>, vector<8x4xf32>,
    return
  }
  func.func @transform_0(%arg0: i32) -> (i32, i32) {
    %c0_i32 = arith.constant 0 : i32
    %c0_i32_0 = arith.constant 0 : i32
    return %arg0, %c0_i32 : i32, i32
  }
  func.func @transform_1(%arg0: i32) -> (i32, i32) {
    %c0_i32 = arith.constant 0 : i32
    %c0_i32_0 = arith.constant 0 : i32
    %c0_i32_1 = arith.constant 0 : i32
    return %c0_i32, %c0_i32_0 : i32, i32
  }
  func.func @transform_2(%arg0: i32) -> (i32, i32) {
    %c0_i32 = arith.constant 0 : i32
    %c0_i32_0 = arith.constant 0 : i32
    %c0_i32_1 = arith.constant 0 : i32
    return %c0_i32, %c0_i32_0 : i32, i32
  }
  func.func @transform_3(%arg0: i32) -> (i32, i32) {
    %c0_i32 = arith.constant 0 : i32
    %c0_i32_0 = arith.constant 0 : i32
    %c0_i32_1 = arith.constant 0 : i32
    return %c0_i32, %c0_i32_0 : i32, i32
  }
  func.func @transform_4(%arg0: i32) -> (i32, i32) {
    %c0_i32 = arith.constant 0 : i32
    %c0_i32_0 = arith.constant 0 : i32
    %c0_i32_1 = arith.constant 0 : i32
    return %c0_i32, %c0_i32_0 : i32, i32
  }
  func.func @transform_5(%arg0: i32) -> (i32, i32) {
    %c0_i32 = arith.constant 0 : i32
    %c0_i32_0 = arith.constant 0 : i32
    %c0_i32_1 = arith.constant 0 : i32
    return %c0_i32, %c0_i32_0 : i32, i32
  }
  func.func @transform_6(%arg0: i32) -> (i32, i32) {
    %c0_i32 = arith.constant 0 : i32
    %c0_i32_0 = arith.constant 0 : i32
    %c0_i32_1 = arith.constant 0 : i32
    return %c0_i32, %c0_i32_0 : i32, i32
  }
  func.func @transform_7(%arg0: i32) -> (i32, i32) {
    %c0_i32 = arith.constant 0 : i32
    %c0_i32_0 = arith.constant 0 : i32
    return %arg0, %c0_i32 : i32, i32
  }
}

</mosaic_0001>

<llo_original>
// kernel: mlp_policy_forward.1
$region0: #{mlp_policy_forward.1}
  #allocation0 [shape = 'u32[]', space=smem, size = 0x4, offset = 0x4, fixed_abs, tag = 'smem constant byte address 0x4 - core index']
  #allocation1 [shape = 'u32[144,128]{1,0:T(1,128)}', space=vmem, size = 0x12000, scoped, tag = 'internal scratch']
  %s0 = inlined_call_operand.vmem [shape: f32[8,16], index: 0, kind: input, shape index: {}]
  %s1 = inlined_call_operand.vmem [shape: bf16[16,128], index: 1, kind: input, shape index: {}]
  %s2 = inlined_call_operand.vmem [shape: f32[1,128], index: 2, kind: input, shape index: {}]
  %s3 = inlined_call_operand.vmem [shape: bf16[128,128], index: 3, kind: input, shape index: {}]
  %s4 = inlined_call_operand.vmem [shape: f32[1,128], index: 4, kind: input, shape index: {}]
  %s5 = inlined_call_operand.vmem [shape: bf16[128,128], index: 5, kind: input, shape index: {}]
  %s6 = inlined_call_operand.vmem [shape: f32[1,128], index: 6, kind: input, shape index: {}]
  %s7 = inlined_call_operand.vmem [shape: f32[8,4], index: 7, kind: output, shape index: {}]
  %s8 = sld [smem:[#allocation0]]
  $region38: #{mlp_policy_forward.1} parent=0
    _
  %s10 = ssub.s32 1, %s8
  %s11 = scalar_select 0, %s10, %s8
  // Predicated region
  $region2: #{mlp_policy_forward.1} parent=0 // pred_check
    _
  $region3: #{mlp_policy_forward.1} parent=0 // pred_check_branch
    %13 = sbr.rel (0) target = $region5
  $region4: #{mlp_policy_forward.1} parent=0 // pred_region
    _
  $region5: #{mlp_policy_forward.1} parent=0 // pred_fallthru
    _
  // Predicated region
  $region6: #{mlp_policy_forward.1} parent=0 // pred_check
    _
  $region7: #{mlp_policy_forward.1} parent=0 // pred_check_branch
    %15 = sbr.rel (0) target = $region9
  $region8: #{mlp_policy_forward.1} parent=0 // pred_region
    _
  $region9: #{mlp_policy_forward.1} parent=0 // pred_fallthru
    _
  // Predicated region
  $region10: #{mlp_policy_forward.1} parent=0 // pred_check
    _
  $region11: #{mlp_policy_forward.1} parent=0 // pred_check_branch
    %17 = sbr.rel (0) target = $region13
  $region12: #{mlp_policy_forward.1} parent=0 // pred_region
    _
  $region13: #{mlp_policy_forward.1} parent=0 // pred_fallthru
    _
  // Predicated region
  $region14: #{mlp_policy_forward.1} parent=0 // pred_check
    _
  $region15: #{mlp_policy_forward.1} parent=0 // pred_check_branch
    %19 = sbr.rel (0) target = $region17
  $region16: #{mlp_policy_forward.1} parent=0 // pred_region
    _
  $region17: #{mlp_policy_forward.1} parent=0 // pred_fallthru
    _
  // Predicated region
  $region18: #{mlp_policy_forward.1} parent=0 // pred_check
    _
  $region19: #{mlp_policy_forward.1} parent=0 // pred_check_branch
    %21 = sbr.rel (0) target = $region21
  $region20: #{mlp_policy_forward.1} parent=0 // pred_region
    _
  $region21: #{mlp_policy_forward.1} parent=0 // pred_fallthru
    _
  // Predicated region
  $region22: #{mlp_policy_forward.1} parent=0 // pred_check
    _
  $region23: #{mlp_policy_forward.1} parent=0 // pred_check_branch
    %23 = sbr.rel (0) target = $region25
  $region24: #{mlp_policy_forward.1} parent=0 // pred_region
    _
  $region25: #{mlp_policy_forward.1} parent=0 // pred_fallthru
    _
  // Predicated region
  $region26: #{mlp_policy_forward.1} parent=0 // pred_check
    _
  $region27: #{mlp_policy_forward.1} parent=0 // pred_check_branch
    %25 = sbr.rel (0) target = $region29
  $region28: #{mlp_policy_forward.1} parent=0 // pred_region
    _
  $region29: #{mlp_policy_forward.1} parent=0 // pred_fallthru
    _
  %v27 = vld [vmem:[%s0] sm:$0xff]
  %v28 = vpack.c.bf16 %v27, %v27
  %v29 = vld [vmem:[%s1] sm:$0xf]
  %v30 = vld [vmem:[%s1 + $0x4] sm:$0xf]
  %v31 = vld [vmem:[%s2] sm:$0x1]
  %v33 = vlaneseq
  %v34 = vshrl.u32 %v33, 7
  %v35 = vsub.s32 0, %v34
  %v36 = vrot.slane %v31, %v35
  %v40 = vunpack.c.l.b16 %v29
  %v41 = vunpack.c.l.b16 %v30
  %v42 = vpack.c.b16 %v41, %v40
  %vm44 = vcmask 130048
  %v46 = vsel %vm44, %v28, 0
  %48 = vmatprep.subr.bf16.mxu0 0
  %49 = vmatpush1.bf16.msra.mxu0 0
  %50 = vmatprep.subr.bf16.mxu0 0
  %51 = vmatpush1.bf16.msra.mxu0 0
  %52 = vmatprep.subr.bf16.mxu0 0
  %53 = vmatpush1.bf16.msra.mxu0 0
  %54 = vmatprep.subr.bf16.mxu0 0
  %55 = vmatpush1.bf16.msra.mxu0 0
  %56 = vmatprep.subr.bf16.mxu0 0
  %57 = vmatpush1.bf16.msra.mxu0 0
  %58 = vmatprep.subr.bf16.mxu0 0
  %59 = vmatpush1.bf16.msra.mxu0 0
  %60 = vmatprep.subr.bf16.mxu0 0
  %61 = vmatpush1.bf16.msra.mxu0 0
  %62 = vmatprep.subr.bf16.mxu0 0
  %63 = vmatpush1.bf16.msra.mxu0 %v42
  %64 = vmatprep.subr.bf16.mxu0 0
  %65 = vmatpush2.bf16.msra.mxu0 0
  %66 = vmatprep.subr.bf16.mxu0 0
  %67 = vmatpush2.bf16.msra.mxu0 0
  %68 = vmatprep.subr.bf16.mxu0 0
  %69 = vmatpush2.bf16.msra.mxu0 0
  %70 = vmatprep.subr.bf16.mxu0 0
  %71 = vmatpush2.bf16.msra.mxu0 0
  %72 = vmatprep.subr.bf16.mxu0 0
  %73 = vmatpush2.bf16.msra.mxu0 0
  %74 = vmatprep.subr.bf16.mxu0 0
  %75 = vmatpush2.bf16.msra.mxu0 0
  %76 = vmatprep.subr.bf16.mxu0 0
  %77 = vmatpush2.bf16.msra.mxu0 0
  %78 = vmatprep.subr.bf16.mxu0 0
  %79 = vmatpush2.bf16.msra.mxu0 0
  %80 = vmatprep.mubr.bf16.mxu0 0
  %81 = vmatmul.mubr.bf16.gmra.mxu0 %v46
  %v82 = vpop.f32.mrf.mxu0
  %v83 = vadd.f32 %v36, %v82
  %v84 = vpop.f32.mrf.mxu0
  %v85 = vpop.f32.mrf.mxu0
  %v86 = vpop.f32.mrf.mxu0
  %87 = vdwg.mxu0
  %v88 = vtanh.pop %v83
  %v89 = vpack.c.bf16 %v88, %v88
  %v90 = vld [vmem:[%s3] sm:$0xf]
  %v91 = vld [vmem:[%s3 + $0x4] sm:$0xf]
  %v92 = vld [vmem:[%s3 + $0x8] sm:$0xf]
  %v93 = vld [vmem:[%s3 + $0xc] sm:$0xf]
  %v94 = vld [vmem:[%s3 + $0x10] sm:$0xf]
  %v95 = vld [vmem:[%s3 + $0x14] sm:$0xf]
  %v96 = vld [vmem:[%s3 + $0x18] sm:$0xf]
  %v97 = vld [vmem:[%s3 + $0x1c] sm:$0xf]
  %v98 = vld [vmem:[%s3 + $0x20] sm:$0xf]
  %v99 = vld [vmem:[%s3 + $0x24] sm:$0xf]
  %v100 = vld [vmem:[%s3 + $0x28] sm:$0xf]
  %v101 = vld [vmem:[%s3 + $0x2c] sm:$0xf]
  %v102 = vld [vmem:[%s3 + $0x30] sm:$0xf]
  %v103 = vld [vmem:[%s3 + $0x34] sm:$0xf]
  %v104 = vld [vmem:[%s3 + $0x38] sm:$0xf]
  %v105 = vld [vmem:[%s3 + $0x3c] sm:$0xf]
  %v106 = vld [vmem:[%s4] sm:$0x1]
  %v108 = vlaneseq
  %v109 = vshrl.u32 %v108, 7
  %v110 = vsub.s32 0, %v109
  %v111 = vrot.slane %v106, %v110
  %v129 = vunpack.c.l.b16 %v90
  %v130 = vunpack.c.l.b16 %v91
  %v131 = vunpack.c.l.b16 %v92
  %v132 = vunpack.c.l.b16 %v93
  %v133 = vunpack.c.l.b16 %v94
  %v134 = vunpack.c.l.b16 %v95
  %v135 = vunpack.c.l.b16 %v96
  %v136 = vunpack.c.l.b16 %v97
  %v137 = vunpack.c.l.b16 %v98
  %v138 = vunpack.c.l.b16 %v99
  %v139 = vunpack.c.l.b16 %v100
  %v140 = vunpack.c.l.b16 %v101
  %v141 = vunpack.c.l.b16 %v102
  %v142 = vunpack.c.l.b16 %v103
  %v143 = vunpack.c.l.b16 %v104
  %v144 = vunpack.c.l.b16 %v105
  %v145 = vpack.c.b16 %v130, %v129
  %v146 = vpack.c.b16 %v132, %v131
  %v147 = vpack.c.b16 %v134, %v133
  %v148 = vpack.c.b16 %v136, %v135
  %v149 = vpack.c.b16 %v138, %v137
  %v150 = vpack.c.b16 %v140, %v139
  %v151 = vpack.c.b16 %v142, %v141
  %v152 = vpack.c.b16 %v144, %v143
  %161 = vmatprep.subr.bf16.mxu0 0
  %162 = vmatpush1.bf16.msra.mxu0 %v152
  %163 = vmatprep.subr.bf16.mxu0 0
  %164 = vmatpush1.bf16.msra.mxu0 %v151
  %165 = vmatprep.subr.bf16.mxu0 0
  %166 = vmatpush1.bf16.msra.mxu0 %v150
  %167 = vmatprep.subr.bf16.mxu0 0
  %168 = vmatpush1.bf16.msra.mxu0 %v149
  %169 = vmatprep.subr.bf16.mxu0 0
  %170 = vmatpush1.bf16.msra.mxu0 %v148
  %171 = vmatprep.subr.bf16.mxu0 0
  %172 = vmatpush1.bf16.msra.mxu0 %v147
  %173 = vmatprep.subr.bf16.mxu0 0
  %174 = vmatpush1.bf16.msra.mxu0 %v146
  %175 = vmatprep.subr.bf16.mxu0 0
  %176 = vmatpush1.bf16.msra.mxu0 %v145
  %177 = vmatprep.subr.bf16.mxu0 0
  %178 = vmatpush2.bf16.msra.mxu0 0
  %179 = vmatprep.subr.bf16.mxu0 0
  %180 = vmatpush2.bf16.msra.mxu0 0
  %181 = vmatprep.subr.bf16.mxu0 0
  %182 = vmatpush2.bf16.msra.mxu0 0
  %183 = vmatprep.subr.bf16.mxu0 0
  %184 = vmatpush2.bf16.msra.mxu0 0
  %185 = vmatprep.subr.bf16.mxu0 0
  %186 = vmatpush2.bf16.msra.mxu0 0
  %187 = vmatprep.subr.bf16.mxu0 0
  %188 = vmatpush2.bf16.msra.mxu0 0
  %189 = vmatprep.subr.bf16.mxu0 0
  %190 = vmatpush2.bf16.msra.mxu0 0
  %191 = vmatprep.subr.bf16.mxu0 0
  %192 = vmatpush2.bf16.msra.mxu0 0
  %193 = vmatprep.mubr.bf16.mxu0 0
  %194 = vmatmul.mubr.bf16.gmra.mxu0 %v89
  %v195 = vpop.f32.mrf.mxu0
  %v196 = vadd.f32 %v111, %v195
  %v197 = vpop.f32.mrf.mxu0
  %v198 = vpop.f32.mrf.mxu0
  %v199 = vpop.f32.mrf.mxu0
  %200 = vdwg.mxu0
  %v201 = vtanh.pop %v196
  %v202 = vpack.c.bf16 %v201, %v201
  %v203 = vld [vmem:[%s5] sm:$0xf]
  %v204 = vld [vmem:[%s5 + $0x4] sm:$0xf]
  %v205 = vld [vmem:[%s5 + $0x8] sm:$0xf]
  %v206 = vld [vmem:[%s5 + $0xc] sm:$0xf]
  %v207 = vld [vmem:[%s5 + $0x10] sm:$0xf]
  %v208 = vld [vmem:[%s5 + $0x14] sm:$0xf]
  %v209 = vld [vmem:[%s5 + $0x18] sm:$0xf]
  %v210 = vld [vmem:[%s5 + $0x1c] sm:$0xf]
  %v211 = vld [vmem:[%s5 + $0x20] sm:$0xf]
  %v212 = vld [vmem:[%s5 + $0x24] sm:$0xf]
  %v213 = vld [vmem:[%s5 + $0x28] sm:$0xf]
  %v214 = vld [vmem:[%s5 + $0x2c] sm:$0xf]
  %v215 = vld [vmem:[%s5 + $0x30] sm:$0xf]
  %v216 = vld [vmem:[%s5 + $0x34] sm:$0xf]
  %v217 = vld [vmem:[%s5 + $0x38] sm:$0xf]
  %v218 = vld [vmem:[%s5 + $0x3c] sm:$0xf]
  %v219 = vld [vmem:[%s6] sm:$0x1]
  %v221 = vlaneseq
  %v222 = vshrl.u32 %v221, 7
  %v223 = vsub.s32 0, %v222
  %v224 = vrot.slane %v219, %v223
  %v242 = vunpack.c.l.b16 %v203
  %v243 = vunpack.c.l.b16 %v204
  %v244 = vunpack.c.l.b16 %v205
  %v245 = vunpack.c.l.b16 %v206
  %v246 = vunpack.c.l.b16 %v207
  %v247 = vunpack.c.l.b16 %v208
  %v248 = vunpack.c.l.b16 %v209
  %v249 = vunpack.c.l.b16 %v210
  %v250 = vunpack.c.l.b16 %v211
  %v251 = vunpack.c.l.b16 %v212
  %v252 = vunpack.c.l.b16 %v213
  %v253 = vunpack.c.l.b16 %v214
  %v254 = vunpack.c.l.b16 %v215
  %v255 = vunpack.c.l.b16 %v216
  %v256 = vunpack.c.l.b16 %v217
  %v257 = vunpack.c.l.b16 %v218
  %v258 = vpack.c.b16 %v243, %v242
  %v259 = vpack.c.b16 %v245, %v244
  %v260 = vpack.c.b16 %v247, %v246
  %v261 = vpack.c.b16 %v249, %v248
  %v262 = vpack.c.b16 %v251, %v250
  %v263 = vpack.c.b16 %v253, %v252
  %v264 = vpack.c.b16 %v255, %v254
  %v265 = vpack.c.b16 %v257, %v256
  %274 = vmatprep.subr.bf16.mxu0 0
  %275 = vmatpush1.bf16.msra.mxu0 %v265
  %276 = vmatprep.subr.bf16.mxu0 0
  %277 = vmatpush1.bf16.msra.mxu0 %v264
  %278 = vmatprep.subr.bf16.mxu0 0
  %279 = vmatpush1.bf16.msra.mxu0 %v263
  %280 = vmatprep.subr.bf16.mxu0 0
  %281 = vmatpush1.bf16.msra.mxu0 %v262
  %282 = vmatprep.subr.bf16.mxu0 0
  %283 = vmatpush1.bf16.msra.mxu0 %v261
  %284 = vmatprep.subr.bf16.mxu0 0
  %285 = vmatpush1.bf16.msra.mxu0 %v260
  %286 = vmatprep.subr.bf16.mxu0 0
  %287 = vmatpush1.bf16.msra.mxu0 %v259
  %288 = vmatprep.subr.bf16.mxu0 0
  %289 = vmatpush1.bf16.msra.mxu0 %v258
  %290 = vmatprep.subr.bf16.mxu0 0
  %291 = vmatpush2.bf16.msra.mxu0 0
  %292 = vmatprep.subr.bf16.mxu0 0
  %293 = vmatpush2.bf16.msra.mxu0 0
  %294 = vmatprep.subr.bf16.mxu0 0
  %295 = vmatpush2.bf16.msra.mxu0 0
  %296 = vmatprep.subr.bf16.mxu0 0
  %297 = vmatpush2.bf16.msra.mxu0 0
  %298 = vmatprep.subr.bf16.mxu0 0
  %299 = vmatpush2.bf16.msra.mxu0 0
  %300 = vmatprep.subr.bf16.mxu0 0
  %301 = vmatpush2.bf16.msra.mxu0 0
  %302 = vmatprep.subr.bf16.mxu0 0
  %303 = vmatpush2.bf16.msra.mxu0 0
  %304 = vmatprep.subr.bf16.mxu0 0
  %305 = vmatpush2.bf16.msra.mxu0 0
  %306 = vmatprep.mubr.bf16.mxu0 0
  %307 = vmatmul.mubr.bf16.gmra.mxu0 %v202
  %v308 = vpop.f32.mrf.mxu0
  %v309 = vadd.f32 %v224, %v308
  %v310 = vpop.f32.mrf.mxu0
  %v311 = vpop.f32.mrf.mxu0
  %v312 = vpop.f32.mrf.mxu0
  %313 = vdwg.mxu0
  %vm314 = vcmask 31744
  %315 = vst.msk [vmem:[%s7] sm:$0xff] %vm314, %v309
  // Predicated region
  $region30: #{mlp_policy_forward.1} parent=0 // pred_check
    _
  $region31: #{mlp_policy_forward.1} parent=0 // pred_check_branch
    %317 = sbr.rel (0) target = $region33
  $region32: #{mlp_policy_forward.1} parent=0 // pred_region
    _
  $region33: #{mlp_policy_forward.1} parent=0 // pred_fallthru
    _
  // Predicated region
  $region34: #{mlp_policy_forward.1} parent=0 // pred_check
    _
  $region35: #{mlp_policy_forward.1} parent=0 // pred_check_branch
    %319 = sbr.rel (0) target = $region37
  $region36: #{mlp_policy_forward.1} parent=0 // pred_region
    _
  $region37: #{mlp_policy_forward.1} parent=0 // pred_fallthru
    _

</llo_original>
